<compile_context>
chip_gen: v7x
topology: tpu7x:2x2x1
jax: 0.10.0
libtpu: 0.0.40
codegen_flags: <defaults>
</compile_context>

<pallas_src>
import functools

import jax
import jax.numpy as jnp
from jax import lax
from jax.experimental import pallas as pl
from jax.experimental.pallas import tpu as pltpu

_LANE = 128
_HALO = 128              # left/right halo width: supports padding <= 128 and K <= 129 + padding
_TARGET_CONTRACT = 256   # aim each MXU contraction >= 256 (v6e/v7x width; fine on v5e too)


def _round_up(a, m):
    return ((a + m - 1) // m) * m


def _vmem_estimate(TL, KC, C_in, C_in_p, C_out, K, xbytes, cbytes, obytes):
    W = TL + 2 * _HALO
    return (2 * C_in * TL * xbytes                  # main x tile, double buffered
            + 4 * C_in * _HALO * xbytes             # two halos, double buffered
            + C_out * K * C_in_p * cbytes           # folded weights (single buffer)
            + 2 * C_out * TL * obytes               # output tile, double buffered
            + C_in_p * W * cbytes                   # contiguous window scratch
            + (KC * C_in_p * TL * cbytes if KC > 1 else 0)  # slab scratch
            + C_out * TL * 4                        # f32 accumulator
            + C_out * 4)                            # bias


def _vmem_limit_bytes():
    cap = 64 * 1024 * 1024
    try:
        cap = int(getattr(pltpu.get_tpu_info(), "vmem_capacity_bytes", cap))
    except Exception:
        pass
    # ~60% of physical VMEM: ~38 MiB on v7x (64 MiB/TC), ~77 MiB on v5e/v6e.
    return max(min(int(cap * 0.6), 96 * 1024 * 1024), 32 * 1024 * 1024)


def _conv1d_kernel(xl_ref, xm_ref, xr_ref, w_ref, b_ref, o_ref, win_ref,
                   *maybe_slab, K, P, TL, C_in, C_in_p, KC, L, cdt):
    """One (batch, L-tile) grid step.

    xl_ref: (1, C_in, HALO)    left halo of x   (HBM dtype; clamped/garbage cols masked)
    xm_ref: (1, C_in, TL)      main x tile
    xr_ref: (1, C_in, HALO)    right halo of x
    w_ref:  (C_out, K*C_in_p)  im2col-folded weights (compute dtype, zero pad rows)
    b_ref:  (C_out, 1)         bias (f32)
    o_ref:  (1, C_out, TL)     output tile (partial trailing block handled by Pallas)
    win_ref:(C_in_p, HALO+TL+HALO) contiguous window scratch (compute dtype)
    maybe_slab: optional (KC*C_in_p, TL) slab scratch (only when KC > 1)
    """
    slab_ref = maybe_slab[0] if maybe_slab else None
    l = pl.program_id(1)
    g0 = l * TL                       # first output column of this tile
    W = _HALO + TL + _HALO

    # ---- assemble one contiguous, zero-padded window in VMEM ----------------
    # window column t  <->  original x column (g0 - HALO + t).  Columns outside
    # [0, L) are the conv zero padding (or garbage from clamped/partial blocks)
    # and are masked to zero here; the cast to the compute dtype happens at the
    # same store (no HBM prepass).
    def masked(piece_ref, col0, check_low):
        piece = piece_ref[0]
        width = piece.shape[-1]
        col = lax.broadcasted_iota(jnp.int32, (1, width), 1) + col0
        valid = col < L
        if check_low:
            valid = jnp.logical_and(valid, col >= 0)
        return jnp.where(valid, piece, 0).astype(cdt)

    win_ref[:C_in, 0:_HALO] = masked(xl_ref, g0 - _HALO, True)
    win_ref[:C_in, _HALO:_HALO + TL] = masked(xm_ref, g0, False)
    win_ref[:C_in, _HALO + TL:W] = masked(xr_ref, g0 + TL, False)
    if C_in_p > C_in:                 # zero the sublane pad rows
        win_ref[C_in:, :] = jnp.zeros((C_in_p - C_in, W), cdt)

    # ---- K-tap im2col matmul, chunked so each contraction is >= KC*C_in_p ---
    # window index of tap k, output column t:  HALO - P + k + t.
    n_chunks = -(-K // KC)
    acc = None
    for chunk in range(n_chunks):
        k0 = chunk * KC
        kc = min(KC, K - k0)
        if kc == 1:
            # Contraction C_in_p already large (or leftover tap): matmul
            # straight off the window slice, no slab copy.
            off = _HALO - P + k0
            rhs = win_ref[:, off:off + TL]
        else:
            for j in range(kc):
                off = _HALO - P + (k0 + j)
                slab_ref[j * C_in_p:(j + 1) * C_in_p, :] = win_ref[:, off:off + TL]
            rhs = slab_ref[:kc * C_in_p, :]
        lhs = w_ref[:, k0 * C_in_p:(k0 + kc) * C_in_p]
        part = jnp.dot(lhs, rhs, preferred_element_type=jnp.float32)
        acc = part if acc is None else acc + part

    o_ref[0] = (acc + b_ref[...]).astype(o_ref.dtype)


def conv1d_wrapper_forward(x, weight, bias=None, *, stride=1, padding=0,
                           dilation=1, groups=1, modes=None, block_l=2048,
                           compute_dtype=jnp.bfloat16, out_dtype=None):
    """Forward of Conv1dWrapper.

    x:      (B, C_in, L)        -- PyTorch NCL layout
    weight: (C_out, C_in, K)
    bias:   (C_out,) or None
    modes:  optional int array selecting output filters (weight[modes], bias[modes]).
    """
    # TODO(synk): only stride=1, dilation=1, groups=1 (the nn.Conv1d defaults
    # this wrapper is used with) are implemented in-kernel.
    assert stride == 1 and dilation == 1 and groups == 1

    if modes is not None:
        weight = jnp.take(weight, modes, axis=0)
        if bias is not None:
            bias = jnp.take(bias, modes, axis=0)

    B, C_in, L = x.shape
    C_out, _, K = weight.shape
    P = int(padding)
    L_out = L + 2 * P - K + 1
    assert L_out > 0
    # TODO(synk): widen the halo for padding > 128 or K > 129 + padding.
    assert P <= _HALO and K - 1 - P <= _HALO, "padding <= 128 and K <= 129 + padding supported"

    out_dtype = x.dtype if out_dtype is None else out_dtype
    cdt = compute_dtype
    xbytes = jnp.dtype(x.dtype).itemsize
    cbytes = jnp.dtype(cdt).itemsize
    obytes = jnp.dtype(out_dtype).itemsize

    # Sublane-pad the im2col rows (aligned tap copies / better vreg use).
    C_in_p = _round_up(C_in, 8)
    # Taps per matmul chunk: keep the MXU contraction >= _TARGET_CONTRACT.
    KC = max(1, min(-(-_TARGET_CONTRACT // C_in_p), K))

    # Length-tile selection under a generation-aware VMEM budget.
    vmem_limit = _vmem_limit_bytes()
    vmem_budget = int(vmem_limit * 0.8)   # leave headroom for Mosaic internals
    TL = _round_up(max(min(block_l, L_out), 1), _LANE)
    while TL > _LANE and _vmem_estimate(TL, KC, C_in, C_in_p, C_out, K,
                                        xbytes, cbytes, obytes) > vmem_budget:
        TL = max(_round_up(TL // 2, _LANE), _LANE)

    grid_l = -(-L_out // TL)
    halo_step = TL // _HALO
    max_halo_idx = -(-L // _HALO) - 1
    max_main_idx = -(-L // TL) - 1

    # im2col-folded, row-padded weights: w2[o, k*C_in_p + c] = weight[o, c, k].
    w_p = jnp.zeros((C_out, K, C_in_p), weight.dtype)
    w_p = w_p.at[:, :, :C_in].set(jnp.transpose(weight, (0, 2, 1)))
    w2 = w_p.reshape(C_out, K * C_in_p).astype(cdt)

    if bias is None:
        b2 = jnp.zeros((C_out, 1), jnp.float32)
    else:
        b2 = bias.astype(jnp.float32).reshape(C_out, 1)

    kernel = functools.partial(_conv1d_kernel, K=K, P=P, TL=TL, C_in=C_in,
                               C_in_p=C_in_p, KC=KC, L=L, cdt=cdt)

    W = TL + 2 * _HALO
    scratch = [pltpu.VMEM((C_in_p, W), cdt)]
    if KC > 1:
        scratch.append(pltpu.VMEM((KC * C_in_p, TL), cdt))

    # NOTE(v7x): both grid axes are "parallel"; keep B * grid_l >= 2 (and
    # ideally even) so the two TensorCores both get work.
    out = pl.pallas_call(
        kernel,
        out_shape=jax.ShapeDtypeStruct((B, C_out, L_out), out_dtype),
        grid_spec=pltpu.PrefetchScalarGridSpec(
            num_scalar_prefetch=0,
            grid=(B, grid_l),
            in_specs=[
                # left halo: original x columns [l*TL - HALO, l*TL)
                pl.BlockSpec(
                    (1, C_in, _HALO),
                    lambda b, l: (b, 0, jnp.minimum(
                        jnp.maximum(l * halo_step - 1, 0), max_halo_idx))),
                # main tile: original x columns [l*TL, l*TL + TL)
                pl.BlockSpec(
                    (1, C_in, TL),
                    lambda b, l: (b, 0, jnp.minimum(l, max_main_idx))),
                # right halo: original x columns [l*TL + TL, l*TL + TL + HALO)
                pl.BlockSpec(
                    (1, C_in, _HALO),
                    lambda b, l: (b, 0, jnp.minimum(
                        (l + 1) * halo_step, max_halo_idx))),
                # grid-invariant weights / bias: single-buffered
                pl.BlockSpec((C_out, K * C_in_p), lambda b, l: (0, 0),
                             pipeline_mode=pl.Buffered(1)),
                pl.BlockSpec((C_out, 1), lambda b, l: (0, 0),
                             pipeline_mode=pl.Buffered(1)),
            ],
            out_specs=pl.BlockSpec((1, C_out, TL), lambda b, l: (b, 0, l)),
            scratch_shapes=scratch,
        ),
        compiler_params=pltpu.CompilerParams(
            dimension_semantics=("parallel", "parallel"),
            vmem_limit_bytes=vmem_limit,
        ),
    )(x, x, x, w2, b2)

    return out                        # (B, C_out, L_out), NCL layout


def _reference_conv1d(x, weight, bias, padding, compute_dtype=jnp.float32):
    # jax.lax reference (NCL / OIK conv); round inputs to the same compute
    # dtype the kernel streams in, then accumulate in f32.
    xc = x.astype(compute_dtype).astype(jnp.float32)
    wc = weight.astype(compute_dtype).astype(jnp.float32)
    out = jax.lax.conv_general_dilated(
        xc, wc, window_strides=(1,), padding=[(padding, padding)],
        dimension_numbers=("NCH", "OIH", "NCH"),
    )
    return (out + bias[None, :, None].astype(jnp.float32)).astype(x.dtype)


if __name__ == "__main__":
    key = jax.random.PRNGKey(0)
    keys = jax.random.split(key, 12)

    # --- base case: small shapes matching the module's (B, C_in, L) layout ---
    B, C_in, L, C_out, K, pad = 2, 4, 16, 8, 3, 1
    x = jax.random.normal(keys[0], (B, C_in, L), dtype=jnp.float32)
    w = jax.random.normal(keys[1], (C_out, C_in, K), dtype=jnp.float32) * 0.1
    b = jax.random.normal(keys[2], (C_out,), dtype=jnp.float32) * 0.1

    y = jax.block_until_ready(conv1d_wrapper_forward(x, w, b, padding=pad))
    y_ref = _reference_conv1d(x, w, b, pad, compute_dtype=jnp.bfloat16)
    assert y.shape == (B, C_out, L)
    assert jnp.allclose(y, y_ref, atol=1e-2, rtol=1e-2)

    # --- modes path (subset of output filters), padding=0 ---
    modes = jnp.array([0, 2, 5, 7], dtype=jnp.int32)
    y_m = jax.block_until_ready(
        conv1d_wrapper_forward(x, w, b, padding=0, modes=modes))
    y_m_ref = _reference_conv1d(x, w[modes], b[modes], 0,
                                compute_dtype=jnp.bfloat16)
    assert y_m.shape == (B, modes.shape[0], L - K + 1)
    assert jnp.allclose(y_m, y_m_ref, atol=1e-2, rtol=1e-2)

    # --- float32 compute path (tighter tolerance) ---
    y32 = jax.block_until_ready(
        conv1d_wrapper_forward(x, w, b, padding=pad,
                               compute_dtype=jnp.float32))
    y32_ref = _reference_conv1d(x, w, b, pad)
    assert jnp.allclose(y32, y32_ref, atol=2e-3, rtol=2e-3)

    # --- multi length-tile path: halos between tiles + partial tail tile ---
    B2, C_in2, L2, C_out2, K2, pad2 = 2, 4, 400, 16, 5, 2
    x2 = jax.random.normal(keys[3], (B2, C_in2, L2), dtype=jnp.float32)
    w2_ = jax.random.normal(keys[4], (C_out2, C_in2, K2), dtype=jnp.float32) * 0.1
    b2_ = jax.random.normal(keys[5], (C_out2,), dtype=jnp.float32) * 0.1
    y2 = jax.block_until_ready(
        conv1d_wrapper_forward(x2, w2_, b2_, padding=pad2, block_l=128))
    y2_ref = _reference_conv1d(x2, w2_, b2_, pad2, compute_dtype=jnp.bfloat16)
    assert y2.shape == (B2, C_out2, L2)
    assert jnp.allclose(y2, y2_ref, atol=1e-2, rtol=1e-2)

    # --- wide-C_in path (per-tap matmuls, no slab) + bf16 output knob ---
    B3, C_in3, L3, C_out3, K3, pad3 = 1, 256, 200, 32, 3, 1
    x3 = jax.random.normal(keys[6], (B3, C_in3, L3), dtype=jnp.float32)
    w3 = jax.random.normal(keys[7], (C_out3, C_in3, K3), dtype=jnp.float32) * 0.05
    b3 = jax.random.normal(keys[8], (C_out3,), dtype=jnp.float32) * 0.1
    y3 = jax.block_until_ready(
        conv1d_wrapper_forward(x3, w3, b3, padding=pad3, block_l=128,
                               out_dtype=jnp.bfloat16))
    y3_ref = _reference_conv1d(x3, w3, b3, pad3, compute_dtype=jnp.bfloat16)
    assert y3.shape == (B3, C_out3, L3) and y3.dtype == jnp.bfloat16
    assert jnp.allclose(y3.astype(jnp.float32), y3_ref, atol=5e-2, rtol=2e-2)

    # --- chunked-tap path (8 < C_in_p < 256, K not a multiple of the chunk) ---
    B4, C_in4, L4, C_out4, K4, pad4 = 1, 128, 200, 16, 5, 2
    x4 = jax.random.normal(keys[9], (B4, C_in4, L4), dtype=jnp.float32)
    w4 = jax.random.normal(keys[10], (C_out4, C_in4, K4), dtype=jnp.float32) * 0.05
    b4 = jax.random.normal(keys[11], (C_out4,), dtype=jnp.float32) * 0.1
    y4 = jax.block_until_ready(
        conv1d_wrapper_forward(x4, w4, b4, padding=pad4, block_l=128))
    y4_ref = _reference_conv1d(x4, w4, b4, pad4, compute_dtype=jnp.bfloat16)
    assert y4.shape == (B4, C_out4, L4)
    assert jnp.allclose(y4, y4_ref, atol=2e-2, rtol=2e-2)

    print("KERNEL_OK")
</pallas_src>

<mosaic_0001>
module attributes {stable_mosaic.version = 11 : i64} {
  func.func @_conv1d_kernel(%arg0: i32, %arg1: i32, %arg2: memref<1x4x128xf32, #tpu.memory_space<vmem>>, %arg3: memref<1x4x128xf32, #tpu.memory_space<vmem>>, %arg4: memref<1x4x128xf32, #tpu.memory_space<vmem>>, %arg5: memref<8x24xbf16, #tpu.memory_space<vmem>>, %arg6: memref<8x1xf32, #tpu.memory_space<vmem>>, %arg7: memref<1x8x128xf32, #tpu.memory_space<vmem>>, %arg8: memref<8x384xbf16, #tpu.memory_space<vmem>>, %arg9: memref<24x128xbf16, #tpu.memory_space<vmem>>) attributes {dimension_semantics = [#tpu.dimension_semantics<parallel>, #tpu.dimension_semantics<parallel>], iteration_bounds = array<i64: 2, 1>, scalar_prefetch = 0 : i64, scratch_operands = 2 : i64, tpu.core_type = #tpu.core_type<tc>, window_params = [{transform_indices = @transform_0, window_bounds = array<i64: 1, 4, 128>}, {transform_indices = @transform_1, window_bounds = array<i64: 1, 4, 128>}, {transform_indices = @transform_2, window_bounds = array<i64: 1, 4, 128>}, {pipeline_mode = #tpu.pipeline_mode<synchronous>, transform_indices = @transform_3, window_bounds = array<i64: 8, 24>}, {pipeline_mode = #tpu.pipeline_mode<synchronous>, transform_indices = @transform_4, window_bounds = array<i64: 8, 1>}, {transform_indices = @transform_5, window_bounds = array<i64: 1, 8, 128>}]} {
    %c128_i32 = arith.constant 128 : i32
    %0 = arith.muli %arg1, %c128_i32 : i32
    %c128_i32_0 = arith.constant 128 : i32
    %1 = arith.subi %0, %c128_i32_0 : i32
    %c0 = arith.constant 0 : index
    %c0_1 = arith.constant 0 : index
    %c0_2 = arith.constant 0 : index
    %2 = vector.load %arg2[%c0, %c0_1, %c0_2] : memref<1x4x128xf32, #tpu.memory_space<vmem>>, vector<1x4x128xf32>
    %3 = vector.shape_cast %2 : vector<1x4x128xf32> to vector<4x128xf32>
    %4 = tpu.iota {dimensions = array<i32: 1>} : vector<1x128xi32>
    %5 = vector.broadcast %1 : i32 to vector<1x128xi32>
    %6 = arith.addi %4, %5 : vector<1x128xi32>
    %c16_i32 = arith.constant 16 : i32
    %7 = vector.broadcast %c16_i32 : i32 to vector<1x128xi32>
    %8 = arith.cmpi slt, %6, %7 : vector<1x128xi32>
    %c0_i32 = arith.constant 0 : i32
    %9 = vector.broadcast %c0_i32 : i32 to vector<1x128xi32>
    %10 = arith.cmpi sge, %6, %9 : vector<1x128xi32>
    %11 = arith.andi %8, %10 : vector<1x128xi1>
    %c0_i32_3 = arith.constant 0 : i32
    %12 = arith.sitofp %c0_i32_3 : i32 to f32
    %13 = vector.shape_cast %11 : vector<1x128xi1> to vector<1x128xi1>
    %14 = vector.broadcast %13 : vector<1x128xi1> to vector<4x128xi1>
    %15 = vector.broadcast %12 : f32 to vector<4x128xf32>
    %16 = arith.select %14, %3, %15 : vector<4x128xi1>, vector<4x128xf32>
    %17 = arith.truncf %16 : vector<4x128xf32> to vector<4x128xbf16>
    %c0_4 = arith.constant 0 : index
    %c0_5 = arith.constant 0 : index
    %18 = vector.load %arg8[%c0_4, %c0_5] : memref<8x384xbf16, #tpu.memory_space<vmem>>, vector<4x128xbf16>
    tpu.vector_store %arg8[%c0_4, %c0_5], %17 {strides = array<i32>} : memref<8x384xbf16, #tpu.memory_space<vmem>>, vector<4x128xbf16>,
    %c0_6 = arith.constant 0 : index
    %c0_7 = arith.constant 0 : index
    %c0_8 = arith.constant 0 : index
    %19 = vector.load %arg3[%c0_6, %c0_7, %c0_8] : memref<1x4x128xf32, #tpu.memory_space<vmem>>, vector<1x4x128xf32>
    %20 = vector.shape_cast %19 : vector<1x4x128xf32> to vector<4x128xf32>
    %21 = tpu.iota {dimensions = array<i32: 1>} : vector<1x128xi32>
    %22 = vector.broadcast %0 : i32 to vector<1x128xi32>
    %23 = arith.addi %21, %22 : vector<1x128xi32>
    %c16_i32_9 = arith.constant 16 : i32
    %24 = vector.broadcast %c16_i32_9 : i32 to vector<1x128xi32>
    %25 = arith.cmpi slt, %23, %24 : vector<1x128xi32>
    %c0_i32_10 = arith.constant 0 : i32
    %26 = arith.sitofp %c0_i32_10 : i32 to f32
    %27 = vector.shape_cast %25 : vector<1x128xi1> to vector<1x128xi1>
    %28 = vector.broadcast %27 : vector<1x128xi1> to vector<4x128xi1>
    %29 = vector.broadcast %26 : f32 to vector<4x128xf32>
    %30 = arith.select %28, %20, %29 : vector<4x128xi1>, vector<4x128xf32>
    %31 = arith.truncf %30 : vector<4x128xf32> to vector<4x128xbf16>
    %c0_11 = arith.constant 0 : index
    %c128 = arith.constant 128 : index
    %32 = vector.load %arg8[%c0_11, %c128] : memref<8x384xbf16, #tpu.memory_space<vmem>>, vector<4x128xbf16>
    tpu.vector_store %arg8[%c0_11, %c128], %31 {strides = array<i32>} : memref<8x384xbf16, #tpu.memory_space<vmem>>, vector<4x128xbf16>,
    %c128_i32_12 = arith.constant 128 : i32
    %33 = arith.addi %0, %c128_i32_12 : i32
    %c0_13 = arith.constant 0 : index
    %c0_14 = arith.constant 0 : index
    %c0_15 = arith.constant 0 : index
    %34 = vector.load %arg4[%c0_13, %c0_14, %c0_15] : memref<1x4x128xf32, #tpu.memory_space<vmem>>, vector<1x4x128xf32>
    %35 = vector.shape_cast %34 : vector<1x4x128xf32> to vector<4x128xf32>
    %36 = tpu.iota {dimensions = array<i32: 1>} : vector<1x128xi32>
    %37 = vector.broadcast %33 : i32 to vector<1x128xi32>
    %38 = arith.addi %36, %37 : vector<1x128xi32>
    %c16_i32_16 = arith.constant 16 : i32
    %39 = vector.broadcast %c16_i32_16 : i32 to vector<1x128xi32>
    %40 = arith.cmpi slt, %38, %39 : vector<1x128xi32>
    %c0_i32_17 = arith.constant 0 : i32
    %41 = arith.sitofp %c0_i32_17 : i32 to f32
    %42 = vector.shape_cast %40 : vector<1x128xi1> to vector<1x128xi1>
    %43 = vector.broadcast %42 : vector<1x128xi1> to vector<4x128xi1>
    %44 = vector.broadcast %41 : f32 to vector<4x128xf32>
    %45 = arith.select %43, %35, %44 : vector<4x128xi1>, vector<4x128xf32>
    %46 = arith.truncf %45 : vector<4x128xf32> to vector<4x128xbf16>
    %c0_18 = arith.constant 0 : index
    %c256 = arith.constant 256 : index
    %47 = vector.load %arg8[%c0_18, %c256] : memref<8x384xbf16, #tpu.memory_space<vmem>>, vector<4x128xbf16>
    tpu.vector_store %arg8[%c0_18, %c256], %46 {strides = array<i32>} : memref<8x384xbf16, #tpu.memory_space<vmem>>, vector<4x128xbf16>,
    %cst = arith.constant 0.000000e+00 : bf16
    %48 = vector.broadcast %cst : bf16 to vector<4x384xbf16>
    %c4 = arith.constant 4 : index
    %c0_19 = arith.constant 0 : index
    %49 = vector.load %arg8[%c4, %c0_19] : memref<8x384xbf16, #tpu.memory_space<vmem>>, vector<4x384xbf16>
    tpu.vector_store %arg8[%c4, %c0_19], %48 {strides = array<i32>} : memref<8x384xbf16, #tpu.memory_space<vmem>>, vector<4x384xbf16>,
    %c0_20 = arith.constant 0 : index
    %c127 = arith.constant 127 : index
    %50 = vector.load %arg8[%c0_20, %c127] : memref<8x384xbf16, #tpu.memory_space<vmem>>, vector<8x128xbf16>
    %c0_21 = arith.constant 0 : index
    %c0_22 = arith.constant 0 : index
    %51 = vector.load %arg9[%c0_21, %c0_22] : memref<24x128xbf16, #tpu.memory_space<vmem>>, vector<8x128xbf16>
    tpu.vector_store %arg9[%c0_21, %c0_22], %50 {strides = array<i32>} : memref<24x128xbf16, #tpu.memory_space<vmem>>, vector<8x128xbf16>,
    %c0_23 = arith.constant 0 : index
    %c128_24 = arith.constant 128 : index
    %52 = vector.load %arg8[%c0_23, %c128_24] : memref<8x384xbf16, #tpu.memory_space<vmem>>, vector<8x128xbf16>
    %c8 = arith.constant 8 : index
    %c0_25 = arith.constant 0 : index
    %53 = vector.load %arg9[%c8, %c0_25] : memref<24x128xbf16, #tpu.memory_space<vmem>>, vector<8x128xbf16>
    tpu.vector_store %arg9[%c8, %c0_25], %52 {strides = array<i32>} : memref<24x128xbf16, #tpu.memory_space<vmem>>, vector<8x128xbf16>,
    %c0_26 = arith.constant 0 : index
    %c129 = arith.constant 129 : index
    %54 = vector.load %arg8[%c0_26, %c129] : memref<8x384xbf16, #tpu.memory_space<vmem>>, vector<8x128xbf16>
    %c16 = arith.constant 16 : index
    %c0_27 = arith.constant 0 : index
    %55 = vector.load %arg9[%c16, %c0_27] : memref<24x128xbf16, #tpu.memory_space<vmem>>, vector<8x128xbf16>
    tpu.vector_store %arg9[%c16, %c0_27], %54 {strides = array<i32>} : memref<24x128xbf16, #tpu.memory_space<vmem>>, vector<8x128xbf16>,
    %c0_28 = arith.constant 0 : index
    %c0_29 = arith.constant 0 : index
    %56 = vector.load %arg9[%c0_28, %c0_29] : memref<24x128xbf16, #tpu.memory_space<vmem>>, vector<24x128xbf16>
    %c0_30 = arith.constant 0 : index
    %c0_31 = arith.constant 0 : index
    %57 = vector.load %arg5[%c0_30, %c0_31] : memref<8x24xbf16, #tpu.memory_space<vmem>>, vector<8x24xbf16>
    %cst_32 = arith.constant dense<0.000000e+00> : vector<8x128xf32>
    %58 = tpu.matmul %57, %56, %cst_32 {dimension_numbers = #tpu.dot_dimension_numbers<[1], [0], [0], [1], [0, 0, 1, 1], [], []>} : vector<8x24xbf16>, vector<24x128xbf16>, vector<8x128xf32> -> vector<8x128xf32>
    %c0_33 = arith.constant 0 : index
    %c0_34 = arith.constant 0 : index
    %59 = vector.load %arg6[%c0_33, %c0_34] : memref<8x1xf32, #tpu.memory_space<vmem>>, vector<8x1xf32>
    %60 = vector.broadcast %59 : vector<8x1xf32> to vector<8x128xf32>
    %61 = arith.addf %58, %60 : vector<8x128xf32>
    %c0_35 = arith.constant 0 : index
    %c0_36 = arith.constant 0 : index
    %c0_37 = arith.constant 0 : index
    %62 = vector.load %arg7[%c0_35, %c0_36, %c0_37] : memref<1x8x128xf32, #tpu.memory_space<vmem>>, vector<1x8x128xf32>
    %63 = vector.shape_cast %62 : vector<1x8x128xf32> to vector<8x128xf32>
    %64 = vector.shape_cast %61 : vector<8x128xf32> to vector<1x8x128xf32>
    tpu.vector_store %arg7[%c0_35, %c0_36, %c0_37], %64 {strides = array<i32>} : memref<1x8x128xf32, #tpu.memory_space<vmem>>, vector<1x8x128xf32>,
    return
  }
  func.func @transform_0(%arg0: i32, %arg1: i32) -> (i32, i32, i32) {
    %c1_i32 = arith.constant 1 : i32
    %0 = arith.muli %arg1, %c1_i32 : i32
    %c1_i32_0 = arith.constant 1 : i32
    %1 = arith.subi %0, %c1_i32_0 : i32
    %c0_i32 = arith.constant 0 : i32
    %2 = arith.maxsi %1, %c0_i32 : i32
    %c0_i32_1 = arith.constant 0 : i32
    %3 = arith.minsi %2, %c0_i32_1 : i32
    %c0_i32_2 = arith.constant 0 : i32
    %c0_i32_3 = arith.constant 0 : i32
    return %arg0, %c0_i32_2, %3 : i32, i32, i32
  }
  func.func @transform_1(%arg0: i32, %arg1: i32) -> (i32, i32, i32) {
    %c0_i32 = arith.constant 0 : i32
    %0 = arith.minsi %arg1, %c0_i32 : i32
    %c0_i32_0 = arith.constant 0 : i32
    %c0_i32_1 = arith.constant 0 : i32
    return %arg0, %c0_i32_0, %0 : i32, i32, i32
  }
  func.func @transform_2(%arg0: i32, %arg1: i32) -> (i32, i32, i32) {
    %c1_i32 = arith.constant 1 : i32
    %0 = arith.addi %arg1, %c1_i32 : i32
    %c1_i32_0 = arith.constant 1 : i32
    %1 = arith.muli %0, %c1_i32_0 : i32
    %c0_i32 = arith.constant 0 : i32
    %2 = arith.minsi %1, %c0_i32 : i32
    %c0_i32_1 = arith.constant 0 : i32
    %c0_i32_2 = arith.constant 0 : i32
    return %arg0, %c0_i32_1, %2 : i32, i32, i32
  }
  func.func @transform_3(%arg0: i32, %arg1: i32) -> (i32, i32) {
    %c0_i32 = arith.constant 0 : i32
    %c0_i32_0 = arith.constant 0 : i32
    %c0_i32_1 = arith.constant 0 : i32
    return %c0_i32, %c0_i32_0 : i32, i32
  }
  func.func @transform_4(%arg0: i32, %arg1: i32) -> (i32, i32) {
    %c0_i32 = arith.constant 0 : i32
    %c0_i32_0 = arith.constant 0 : i32
    %c0_i32_1 = arith.constant 0 : i32
    return %c0_i32, %c0_i32_0 : i32, i32
  }
  func.func @transform_5(%arg0: i32, %arg1: i32) -> (i32, i32, i32) {
    %c0_i32 = arith.constant 0 : i32
    %c0_i32_0 = arith.constant 0 : i32
    return %arg0, %c0_i32, %arg1 : i32, i32, i32
  }
}

</mosaic_0001>

<llo_original>
// kernel: tpu_custom_call.1
$region0: #{tpu_custom_call.1}
  #allocation0 [shape = 'u32[]', space=smem, size = 0x4, offset = 0x4, fixed_abs, tag = 'smem constant byte address 0x4 - core index']
  #allocation1 [shape = 'u32[144,128]{1,0:T(1,128)}', space=vmem, size = 0x12000, scoped, tag = 'internal scratch']
  #allocation2 [shape = 'bf16[8,384]{1,0:T(8,128)(2,1)}', space=vmem, size = 0x1800, scoped, tag = 'scratch operand']
  #allocation3 [shape = 'bf16[24,128]{1,0:T(8,128)(2,1)}', space=vmem, size = 0x1800, scoped, tag = 'scratch operand']
  %s0 = inlined_call_operand.vmem [shape: f32[2,4,16], index: 0, kind: input, shape index: {}]
  %s1 = inlined_call_operand.hbm [shape: f32[2,4,16], index: 1, kind: input, shape index: {}]
  %s2 = inlined_call_operand.vmem [shape: f32[2,4,16], index: 2, kind: input, shape index: {}]
  %s3 = inlined_call_operand.vmem [shape: bf16[8,24], index: 3, kind: input, shape index: {}]
  %s4 = inlined_call_operand.vmem [shape: f32[8,1], index: 4, kind: input, shape index: {}]
  %s5 = inlined_call_operand.hbm [shape: f32[2,8,16], index: 5, kind: output, shape index: {}]
  %s6 = sld [smem:[#allocation0]]
  $region57: #{tpu_custom_call.1} parent=0
    _
  %s8 = ssub.s32 1, %s6
  %s9 = scalar_select 0, %s8, %s6
  $region1: #{tpu_custom_call.1} parent=0
    #allocation4 [shape = 'u8[4096]{0}', space=vmem, size = 0x1000, scoped, tag = 'input window, operand 1']
    #allocation5 [shape = 's32[2]{0}', space=sflag, size = 0x8, scoped, tag = 'scoped memory for tpu_custom_call.1']
    #allocation6 [shape = 's32[2]{0}', space=sflag, size = 0x8, scoped, tag = 'scoped memory for tpu_custom_call.1']
    #allocation7 [shape = 'u8[8192]{0}', space=vmem, size = 0x2000, scoped, tag = 'output window, operand 0']
    %10 = vsyncpa [#allocation5], 0
    %s11 = scalar_lea.sflag [#allocation5], 1
    %12 = vsyncpa %s11, 0
    %13 = vsyncpa [#allocation6], 0
    %s14 = scalar_lea.sflag [#allocation6], 1
    %15 = vsyncpa %s14, 0
    loop: start=0, step=1, limit=4
    $region2: #{tpu_custom_call.1} parent=1 // loop_pre_header
      _
    $region3: #{tpu_custom_call.1} parent=1 // loop_header
      %s17 = sphi 0, %s21
      %p18 = scmp.ge.s32.totalorder %s17, 4
      %s24 = sphi 0, %s36
      %s25 = sphi 0, %s32
      %s26 = sphi 0, %s24
      %s27 = sphi 0, %s25
      %s28 = sphi 0, %s26
      %s29 = sphi 0, %s27
      %s51 = sphi 0, %s53
      %s54 = sphi 0, %s51
      %s55 = sphi 0, %s54
      %s71 = sphi 0, %s55
      %s83 = sphi 0, %s85
      %s86 = sphi 0, %s83
      %s87 = sphi 0, %s86
      %s103 = sphi 0, %s87
      %s117 = sphi 0, %s119
      %s120 = sphi 0, %s117
      %s121 = sphi 0, %s120
      %s137 = sphi 0, %s121
      %s141 = sphi 0, %s141
      %s143 = sphi 0, %s141
      %s144 = sphi 0, %s143
      %s158 = sphi 0, %s144
      %s162 = sphi 0, %s162
      %s164 = sphi 0, %s162
      %s165 = sphi 0, %s164
      %s179 = sphi 0, %s165
      %s187 = sphi 0, %s189
      %s190 = sphi 0, %s187
      %s191 = sphi 0, %s190
      %s207 = sphi 0, %s191
    $region4: #{tpu_custom_call.1} parent=1 // loop_header_branch
      %20 = sbr.rel (%p18) target = $region8
    $region5: #{tpu_custom_call.1} parent=1 // loop_body
      %s22 = ssub.s32 %s17, 1
      %s23 = ssub.s32 %s17, 2
      %s30 = sadd.s32 1, %s25
      %p31 = scmp.ge.s32.totalorder %s30, 1
      %s32 = scalar_select %p31, 0, %s30
      %s33 = sadd.s32 1, %s24
      %s34 = scalar_select %p31, %s33, %s24
      %p35 = scmp.ge.s32.totalorder %s34, 2
      %s36 = scalar_select %p35, 0, %s34
      %s37 = ssub.s32 %s25, 1
      %p38 = scmp.gt.s32.totalorder %s37, 0
      %s39 = scalar_select %p38, %s37, 0
      %p40 = scmp.lt.s32.totalorder %s39, 0
      %s41 = scalar_select %p40, %s39, 0
      %s42 = ssub.s32 %s32, 1
      %p43 = scmp.gt.s32.totalorder %s42, 0
      %s44 = scalar_select %p43, %s42, 0
      %p45 = scmp.lt.s32.totalorder %s44, 0
      %s46 = scalar_select %p45, %s44, 0
      %s47 = ssub.s32 %s24, %s36
      %s48 = ssub.s32 %s41, %s46
      %s49 = sor.u32 %s47, %s48
      %p50 = scmp.eq.s32.totalorder %s49, 0
      %s52 = sadd.s32 %s51, 1
      %s53 = scalar_select %p50, %s51, %s52
      %p56 = pneg %p50
      %p57 = scmp.eq.s32.totalorder %s17, 1
      %p58 = por %p56, %p57
      %p59 = scmp.ne.s32.totalorder %s51, %s54
      %p60 = scmp.eq.s32.totalorder %s17, 0
      %p61 = por %p59, %p60
      %p62 = scmp.ne.s32.totalorder %s51, %s54
      %p63 = scmp.eq.s32.totalorder %s22, 1
      %p64 = por %p62, %p63
      %p65 = scmp.ne.s32.totalorder %s54, %s55
      %p66 = scmp.eq.s32.totalorder %s22, 0
      %p67 = por %p65, %p66
      %p68 = scmp.ne.s32.totalorder %s54, %s55
      %p69 = scmp.eq.s32.totalorder %s23, 1
      %p70 = por %p68, %p69
      %p72 = scmp.ne.s32.totalorder %s55, %s71
      %p73 = scmp.eq.s32.totalorder %s23, 0
      %p74 = por %p72, %p73
      %p75 = scmp.lt.s32.totalorder %s25, 0
      %s76 = scalar_select %p75, %s25, 0
      %p77 = scmp.lt.s32.totalorder %s32, 0
      %s78 = scalar_select %p77, %s32, 0
      %s79 = ssub.s32 %s24, %s36
      %s80 = ssub.s32 %s76, %s78
      %s81 = sor.u32 %s79, %s80
      %p82 = scmp.eq.s32.totalorder %s81, 0
      %s84 = sadd.s32 %s83, 1
      %s85 = scalar_select %p82, %s83, %s84
      %p88 = pneg %p82
      %p89 = scmp.eq.s32.totalorder %s17, 1
      %p90 = por %p88, %p89
      %p91 = scmp.ne.s32.totalorder %s83, %s86
      %p92 = scmp.eq.s32.totalorder %s17, 0
      %p93 = por %p91, %p92
      %p94 = scmp.ne.s32.totalorder %s83, %s86
      %p95 = scmp.eq.s32.totalorder %s22, 1
      %p96 = por %p94, %p95
      %p97 = scmp.ne.s32.totalorder %s86, %s87
      %p98 = scmp.eq.s32.totalorder %s22, 0
      %p99 = por %p97, %p98
      %p100 = scmp.ne.s32.totalorder %s86, %s87
      %p101 = scmp.eq.s32.totalorder %s23, 1
      %p102 = por %p100, %p101
      %p104 = scmp.ne.s32.totalorder %s87, %s103
      %p105 = scmp.eq.s32.totalorder %s23, 0
      %p106 = por %p104, %p105
      %s107 = sadd.s32 %s25, 1
      %p108 = scmp.lt.s32.totalorder %s107, 0
      %s109 = scalar_select %p108, %s107, 0
      %s110 = sadd.s32 %s32, 1
      %p111 = scmp.lt.s32.totalorder %s110, 0
      %s112 = scalar_select %p111, %s110, 0
      %s113 = ssub.s32 %s24, %s36
      %s114 = ssub.s32 %s109, %s112
      %s115 = sor.u32 %s113, %s114
      %p116 = scmp.eq.s32.totalorder %s115, 0
      %s118 = sadd.s32 %s117, 1
      %s119 = scalar_select %p116, %s117, %s118
      %p122 = pneg %p116
      %p123 = scmp.eq.s32.totalorder %s17, 1
      %p124 = por %p122, %p123
      %p125 = scmp.ne.s32.totalorder %s117, %s120
      %p126 = scmp.eq.s32.totalorder %s17, 0
      %p127 = por %p125, %p126
      %p128 = scmp.ne.s32.totalorder %s117, %s120
      %p129 = scmp.eq.s32.totalorder %s22, 1
      %p130 = por %p128, %p129
      %p131 = scmp.ne.s32.totalorder %s120, %s121
      %p132 = scmp.eq.s32.totalorder %s22, 0
      %p133 = por %p131, %p132
      %p134 = scmp.ne.s32.totalorder %s120, %s121
      %p135 = scmp.eq.s32.totalorder %s23, 1
      %p136 = por %p134, %p135
      %p138 = scmp.ne.s32.totalorder %s121, %s137
      %p139 = scmp.eq.s32.totalorder %s23, 0
      %p140 = por %p138, %p139
      %s142 = sadd.s32 %s141, 1
      %p145 = scmp.eq.s32.totalorder %s17, 1
      %p146 = scmp.ne.s32.totalorder %s141, %s143
      %p147 = scmp.eq.s32.totalorder %s17, 0
      %p148 = por %p146, %p147
      %p149 = scmp.ne.s32.totalorder %s141, %s143
      %p150 = scmp.eq.s32.totalorder %s22, 1
      %p151 = por %p149, %p150
      %p152 = scmp.ne.s32.totalorder %s143, %s144
      %p153 = scmp.eq.s32.totalorder %s22, 0
      %p154 = por %p152, %p153
      %p155 = scmp.ne.s32.totalorder %s143, %s144
      %p156 = scmp.eq.s32.totalorder %s23, 1
      %p157 = por %p155, %p156
      %p159 = scmp.ne.s32.totalorder %s144, %s158
      %p160 = scmp.eq.s32.totalorder %s23, 0
      %p161 = por %p159, %p160
      %s163 = sadd.s32 %s162, 1
      %p166 = scmp.eq.s32.totalorder %s17, 1
      %p167 = scmp.ne.s32.totalorder %s162, %s164
      %p168 = scmp.eq.s32.totalorder %s17, 0
      %p169 = por %p167, %p168
      %p170 = scmp.ne.s32.totalorder %s162, %s164
      %p171 = scmp.eq.s32.totalorder %s22, 1
      %p172 = por %p170, %p171
      %p173 = scmp.ne.s32.totalorder %s164, %s165
      %p174 = scmp.eq.s32.totalorder %s22, 0
      %p175 = por %p173, %p174
      %p176 = scmp.ne.s32.totalorder %s164, %s165
      %p177 = scmp.eq.s32.totalorder %s23, 1
      %p178 = por %p176, %p177
      %p180 = scmp.ne.s32.totalorder %s165, %s179
      %p181 = scmp.eq.s32.totalorder %s23, 0
      %p182 = por %p180, %p181
      %s183 = ssub.s32 %s24, %s36
      %s184 = ssub.s32 %s25, %s32
      %s185 = sor.u32 %s183, %s184
      %p186 = scmp.eq.s32.totalorder %s185, 0
      %s188 = sadd.s32 %s187, 1
      %s189 = scalar_select %p186, %s187, %s188
      %p192 = pneg %p186
      %p193 = scmp.eq.s32.totalorder %s17, 1
      %p194 = por %p192, %p193
      %p195 = scmp.ne.s32.totalorder %s187, %s190
      %p196 = scmp.eq.s32.totalorder %s17, 0
      %p197 = por %p195, %p196
      %p198 = scmp.ne.s32.totalorder %s187, %s190
      %p199 = scmp.eq.s32.totalorder %s22, 1
      %p200 = por %p198, %p199
      %p201 = scmp.ne.s32.totalorder %s190, %s191
      %p202 = scmp.eq.s32.totalorder %s22, 0
      %p203 = por %p201, %p202
      %p204 = scmp.ne.s32.totalorder %s190, %s191
      %p205 = scmp.eq.s32.totalorder %s23, 1
      %p206 = por %p204, %p205
      %p208 = scmp.ne.s32.totalorder %s191, %s207
      %p209 = scmp.eq.s32.totalorder %s23, 0
      %p210 = por %p208, %p209
      %p211 = scmp.le.s32.totalorder 1, %s17
      %p212 = scmp.lt.s32.totalorder %s17, 3
      %p213 = pnand %p211, %p212
      %p214 = pneg %p213
      // Predicated region
      $region9: #{tpu_custom_call.1} parent=5 // pred_check
        _
      $region10: #{tpu_custom_call.1} parent=5 // pred_check_branch
        %216 = sbr.rel (%p213) target = $region12
      $region11: #{tpu_custom_call.1} parent=5 // pred_region
        %s217 = ssub.s32 %s17, 1
        // Predicated region
        $region13: #{tpu_custom_call.1} parent=11 // pred_check
          %p218 = pneg %p154
        $region14: #{tpu_custom_call.1} parent=11 // pred_check_branch
          %220 = sbr.rel (%p218) target = $region16
        $region15: #{tpu_custom_call.1} parent=11 // pred_region
          _
        $region16: #{tpu_custom_call.1} parent=11 // pred_fallthru
          _
        // Predicated region
        $region17: #{tpu_custom_call.1} parent=11 // pred_check
          %p221 = pneg %p175
        $region18: #{tpu_custom_call.1} parent=11 // pred_check_branch
          %223 = sbr.rel (%p221) target = $region20
        $region19: #{tpu_custom_call.1} parent=11 // pred_region
          _
        $region20: #{tpu_custom_call.1} parent=11 // pred_fallthru
          _
      $region12: #{tpu_custom_call.1} parent=5 // pred_fallthru
        _
      %p224 = scmp.lt.s32.totalorder %s17, 2
      // Predicated region
      $region21: #{tpu_custom_call.1} parent=5 // pred_check
        %p225 = pneg %p224
      $region22: #{tpu_custom_call.1} parent=5 // pred_check_branch
        %227 = sbr.rel (%p225) target = $region24
      $region23: #{tpu_custom_call.1} parent=5 // pred_region
        // Predicated region
        $region25: #{tpu_custom_call.1} parent=23 // pred_check
          %p228 = pneg %p61
        $region26: #{tpu_custom_call.1} parent=23 // pred_check_branch
          %230 = sbr.rel (%p228) target = $region28
        $region27: #{tpu_custom_call.1} parent=23 // pred_region
          %s231 = ssub.s32 %s25, 1
          %p232 = scmp.gt.s32.totalorder %s231, 0
          %s233 = scalar_select %p232, %s231, 0
          %p234 = scmp.lt.s32.totalorder %s233, 0
          %s235 = scalar_select %p234, %s233, 0
          %p236 = scmp.lt.s32.totalorder %s24, 1
          %s237 = scalar_select %p236, %s24, 1
          %p238 = scmp.lt.s32.totalorder %s235, 0
          %s239 = scalar_select %p238, %s235, 0
          %s240 = sadd.s32 %s239, %s237
          %s241 = smul.addr %s240, 4
          %s242 = scalar_lea.vmem %s0, %s241
          %s243 = ssub.s32 %s25, 1
          %p244 = scmp.gt.s32.totalorder %s243, 0
          %s245 = scalar_select %p244, %s243, 0
          %p246 = scmp.lt.s32.totalorder %s245, 0
          %s247 = scalar_select %p246, %s245, 0
        $region28: #{tpu_custom_call.1} parent=23 // pred_fallthru
          _
        // Predicated region
        $region29: #{tpu_custom_call.1} parent=23 // pred_check
          %p248 = pneg %p93
        $region30: #{tpu_custom_call.1} parent=23 // pred_check_branch
          %250 = sbr.rel (%p248) target = $region32
        $region31: #{tpu_custom_call.1} parent=23 // pred_region
          %s251 = sand.u32 %s83, 1
          %s252 = scalar_lea.sflag [#allocation5], %s251
          %s253 = sand.u32 %s83, 1
          %s254 = smul.addr %s253, 4
          %s255 = scalar_lea.vmem [#allocation4], %s254
          %p256 = scmp.lt.s32.totalorder %s25, 0
          %s257 = scalar_select %p256, %s25, 0
          %s259 = ssub.s32 64, 64
          %260 = vsyncadd %s252, %s259
          %s261 = sadd.s32 %s257, %s24
          %s262 = smul.addr %s261, 64
          %s263 = scalar_lea.hbm %s1, %s262
          %s265 = sshll.u32 %s255, 4
          %s266 = int_to_ptr.vmem [resolvable:$true] %s265
          %268 = dma.hbm_to_vmem [thread:$0]  %s263, 64, %s266, %s252
        $region32: #{tpu_custom_call.1} parent=23 // pred_fallthru
          _
        // Predicated region
        $region33: #{tpu_custom_call.1} parent=23 // pred_check
          %p269 = pneg %p127
        $region34: #{tpu_custom_call.1} parent=23 // pred_check_branch
          %271 = sbr.rel (%p269) target = $region36
        $region35: #{tpu_custom_call.1} parent=23 // pred_region
          %s272 = sadd.s32 %s25, 1
          %p273 = scmp.lt.s32.totalorder %s272, 0
          %s274 = scalar_select %p273, %s272, 0
          %p275 = scmp.lt.s32.totalorder %s24, 1
          %s276 = scalar_select %p275, %s24, 1
          %p277 = scmp.lt.s32.totalorder %s274, 0
          %s278 = scalar_select %p277, %s274, 0
          %s279 = sadd.s32 %s278, %s276
          %s280 = smul.addr %s279, 4
          %s281 = scalar_lea.vmem %s2, %s280
          %s282 = sadd.s32 %s25, 1
          %p283 = scmp.lt.s32.totalorder %s282, 0
          %s284 = scalar_select %p283, %s282, 0
        $region36: #{tpu_custom_call.1} parent=23 // pred_fallthru
          _
      $region24: #{tpu_custom_call.1} parent=5 // pred_fallthru
        _
      %p285 = scmp.le.s32.totalorder 1, %s17
      %p286 = scmp.lt.s32.totalorder %s17, 3
      %p287 = pnand %p285, %p286
      %p288 = pneg %p287
      // Predicated region
      $region37: #{tpu_custom_call.1} parent=5 // pred_check
        _
      $region38: #{tpu_custom_call.1} parent=5 // pred_check_branch
        %290 = sbr.rel (%p287) target = $region40
      $region39: #{tpu_custom_call.1} parent=5 // pred_region
        %s291 = ssub.s32 %s17, 1
        %s292 = sand.u32 %s86, 1
        %s293 = scalar_lea.sflag [#allocation5], %s292
        %s294 = sand.u32 %s86, 1
        %s295 = smul.addr %s294, 4
        %s296 = scalar_lea.vmem [#allocation4], %s295
        // Predicated region
        $region41: #{tpu_custom_call.1} parent=39 // pred_check
          %p297 = pneg %p99
        $region42: #{tpu_custom_call.1} parent=39 // pred_check_branch
          %299 = sbr.rel (%p297) target = $region44
        $region43: #{tpu_custom_call.1} parent=39 // pred_region
          %300 = dma.done %s293, 64
        $region44: #{tpu_custom_call.1} parent=39 // pred_fallthru
          _
        %s301 = ssub.s32 %s27, 1
        %p302 = scmp.gt.s32.totalorder %s301, 0
        %s303 = scalar_select %p302, %s301, 0
        %p304 = scmp.lt.s32.totalorder %s303, 0
        %s305 = scalar_select %p304, %s303, 0
        %p306 = scmp.lt.s32.totalorder %s26, 1
        %s307 = scalar_select %p306, %s26, 1
        %p308 = scmp.lt.s32.totalorder %s305, 0
        %s309 = scalar_select %p308, %s305, 0
        %s310 = sadd.s32 %s309, %s307
        %s311 = smul.addr %s310, 4
        %s312 = scalar_lea.vmem %s0, %s311
        %p313 = pneg %p67
        %p314 = pneg %p64
        %s315 = sand.u32 %s86, 1
        %s316 = scalar_lea.sflag [#allocation5], %s315
        %s317 = sand.u32 %s86, 1
        %s318 = smul.addr %s317, 4
        %s319 = scalar_lea.vmem [#allocation4], %s318
        %p320 = pneg %p99
        %p321 = pneg %p96
        %s322 = sadd.s32 %s27, 1
        %p323 = scmp.lt.s32.totalorder %s322, 0
        %s324 = scalar_select %p323, %s322, 0
        %p325 = scmp.lt.s32.totalorder %s26, 1
        %s326 = scalar_select %p325, %s26, 1
        %p327 = scmp.lt.s32.totalorder %s324, 0
        %s328 = scalar_select %p327, %s324, 0
        %s329 = sadd.s32 %s328, %s326
        %s330 = smul.addr %s329, 4
        %s331 = scalar_lea.vmem %s2, %s330
        %p332 = pneg %p133
        %p333 = pneg %p130
        %p334 = pneg %p154
        %p335 = pneg %p151
        %p336 = pneg %p175
        %p337 = pneg %p172
        %p338 = pneg %p203
        %p339 = pneg %p200
        %s340 = sand.u32 %s190, 1
        %s341 = scalar_lea.sflag [#allocation6], %s340
        %s342 = sand.u32 %s190, 1
        %s343 = smul.addr %s342, 8
        %s344 = scalar_lea.vmem [#allocation7], %s343
        %s345 = ssub.s32 %s27, 1
        %p346 = scmp.gt.s32.totalorder %s345, 0
        %s347 = scalar_select %p346, %s345, 0
        %p348 = scmp.lt.s32.totalorder %s347, 0
        %s349 = scalar_select %p348, %s347, 0
        %p350 = scmp.lt.s32.totalorder %s26, 1
        %s351 = scalar_select %p350, %s26, 1
        %p352 = scmp.lt.s32.totalorder %s349, 0
        %s353 = scalar_select %p352, %s349, 0
        %s354 = sadd.s32 %s353, %s351
        %s355 = smul.addr %s354, 4
        %s356 = scalar_lea.vmem %s0, %s355
        %s357 = ssub.s32 %s27, 1
        %p358 = scmp.gt.s32.totalorder %s357, 0
        %s359 = scalar_select %p358, %s357, 0
        %p360 = scmp.lt.s32.totalorder %s359, 0
        %s361 = scalar_select %p360, %s359, 0
        %p362 = scmp.lt.s32.totalorder %s27, 0
        %s363 = scalar_select %p362, %s27, 0
        %s364 = sadd.s32 %s27, 1
        %p365 = scmp.lt.s32.totalorder %s364, 0
        %s366 = scalar_select %p365, %s364, 0
        %p367 = scmp.lt.s32.totalorder %s26, 1
        %s368 = scalar_select %p367, %s26, 1
        %p369 = scmp.lt.s32.totalorder %s366, 0
        %s370 = scalar_select %p369, %s366, 0
        %s371 = sadd.s32 %s370, %s368
        %s372 = smul.addr %s371, 4
        %s373 = scalar_lea.vmem %s2, %s372
        %s374 = sadd.s32 %s27, 1
        %p375 = scmp.lt.s32.totalorder %s374, 0
        %s376 = scalar_select %p375, %s374, 0
        %s378 = smul.u32 %s27, 128
        %s379 = ssub.s32 %s378, 128
        %v380 = vld [vmem:[%s356] sm:$0xf]
        %v381 = vlaneseq
        %v382 = vand.u32 %v381, 127
        %v383 = vstv %s379
        %v384 = vadd.s32 %v382, %v383
        %vm385 = vcmp.lt.s32.totalorder %v384, 16
        %vm386 = vcmp.ge.s32.totalorder %v384, 0
        %vm387 = vmand %vm385, %vm386
        %v388 = vsel %vm387, 1, 0
        %vm389 = vcmp.eq.s32.totalorder %v388, 1
        %v390 = vsel %vm389, %v380, 0.0
        %v391 = vpack.c.bf16 %v390, %v390
        %392 = vst [vmem:[#allocation2] sm:$0x3] %v391
        %v393 = vld [vmem:[%s296] sm:$0xf]
        %v394 = vstv %s378
        %v395 = vadd.s32 %v382, %v394
        %vm396 = vcmp.lt.s32.totalorder %v395, 16
        %v397 = vsel %vm396, 1, 0
        %vm398 = vcmp.eq.s32.totalorder %v397, 1
        %v399 = vsel %vm398, %v393, 0.0
        %v400 = vpack.c.bf16 %v399, %v399
        %401 = vst [vmem:[#allocation2 + $0x4] sm:$0x3] %v400
        %s402 = sadd.s32 %s378, 128
        %v403 = vld [vmem:[%s373] sm:$0xf]
        %v404 = vstv %s402
        %v405 = vadd.s32 %v382, %v404
        %vm406 = vcmp.lt.s32.totalorder %v405, 16
        %v407 = vsel %vm406, 1, 0
        %vm408 = vcmp.eq.s32.totalorder %v407, 1
        %v409 = vsel %vm408, %v403, 0.0
        %v410 = vpack.c.bf16 %v409, %v409
        %411 = vst [vmem:[#allocation2 + $0x8] sm:$0x3] %v410
        %412 = vst [vmem:[#allocation2] sm:$0xcc] 0
        %413 = vst [vmem:[#allocation2 + $0x8] sm:$0xc] 0
        %v414 = vld [vmem:[#allocation2] sm:$0xff]
        %416 = vrot.lane.b32.xlu0 %v414, 1
        %v417 = vpop.permute.xlu0 %416
        %v418 = vrot.slane %v417, 4
        %vm419 = vcmask 7168
        %v420 = vsel %vm419, %v417, %v418
        %422 = vst [vmem:[#allocation3] sm:$0xf] %v420
        %v423 = vld [vmem:[#allocation2 + $0x4] sm:$0xf]
        %424 = vst [vmem:[#allocation3 + $0x4] sm:$0xf] %v423
        %v425 = vld [vmem:[#allocation2 + $0x4] sm:$0xff]
        %427 = vrot.lane.b32.xlu0 %v425, 127
        %v428 = vpop.permute.xlu0 %427
        %v429 = vrot.slane %v428, 4
        %vm430 = vcmask 1039360
        %v431 = vsel %vm430, %v428, %v429
        %433 = vst [vmem:[#allocation3 + $0x8] sm:$0xf] %v431
        %v434 = vld [vmem:[#allocation3] sm:$0xf]
        %v435 = vld [vmem:[#allocation3 + $0x4] sm:$0xf]
        %v436 = vld [vmem:[#allocation3 + $0x8] sm:$0xf]
        %v437 = vld [vmem:[%s3] sm:$0xf]
        %v438 = vld [vmem:[%s4] sm:$0xff]
        %440 = vset.pattern.permute.xlu0 0
        %441 = vperm.xlu0 %440, %v438
        %v442 = vpop.permute.xlu0 %441
        %v447 = vunpack.c.l.b16 %v434
        %v448 = vunpack.c.l.b16 %v435
        %v449 = vunpack.c.l.b16 %v436
        %v450 = vpack.c.b16 %v448, %v447
        %v451 = vpack.c.b16 %v449, %v449
        %vm453 = vcmask 195584
        %v455 = vsel %vm453, %v437, 0
        %vm457 = vcmask 1043456
        %v459 = vsel %vm457, %v451, 0
        %461 = vmatprep.subr.bf16.mxu0 0
        %462 = vmatpush1.bf16.msra.mxu0 %v450
        %463 = vmatprep.subr.bf16.mxu0 0
        %464 = vmatpush1.bf16.msra.mxu0 %v459
        %465 = vmatprep.subr.bf16.mxu0 0
        %466 = vmatpush1.bf16.msra.mxu0 0
        %467 = vmatprep.subr.bf16.mxu0 0
        %468 = vmatpush1.bf16.msra.mxu0 0
        %469 = vmatprep.subr.bf16.mxu0 0
        %470 = vmatpush1.bf16.msra.mxu0 0
        %471 = vmatprep.subr.bf16.mxu0 0
        %472 = vmatpush1.bf16.msra.mxu0 0
        %473 = vmatprep.subr.bf16.mxu0 0
        %474 = vmatpush1.bf16.msra.mxu0 0
        %475 = vmatprep.subr.bf16.mxu0 0
        %476 = vmatpush1.bf16.msra.mxu0 0
        %477 = vmatprep.subr.bf16.mxu0 0
        %478 = vmatpush1.bf16.msra.mxu0 0
        %479 = vmatprep.subr.bf16.mxu0 0
        %480 = vmatpush1.bf16.msra.mxu0 0
        %481 = vmatprep.subr.bf16.mxu0 0
        %482 = vmatpush1.bf16.msra.mxu0 0
        %483 = vmatprep.subr.bf16.mxu0 0
        %484 = vmatpush1.bf16.msra.mxu0 0
        %485 = vmatprep.subr.bf16.mxu0 0
        %486 = vmatpush1.bf16.msra.mxu0 0
        %487 = vmatprep.subr.bf16.mxu0 0
        %488 = vmatpush1.bf16.msra.mxu0 0
        %489 = vmatprep.subr.bf16.mxu0 0
        %490 = vmatpush1.bf16.msra.mxu0 0
        %491 = vmatprep.subr.bf16.mxu0 0
        %492 = vmatpush1.bf16.msra.mxu0 0
        %493 = vmatprep.mubr.bf16.mxu0 0
        %494 = vmatmul.mubr.bf16.gmra.mrb[0].mxu0 %v455
        %v495 = vpop.f32.mrb[0].mxu0
        %v496 = vadd.f32 %v442, %v495
        %v497 = vpop.f32.mrb[0].mxu0
        %v498 = vpop.f32.mrb[0].mxu0
        %v499 = vpop.f32.mrb[0].mxu0
        %500 = vdwg.mxu0
        %501 = vst [vmem:[%s344] sm:$0xff] %v496
        %s502 = sand.u32 %s190, 1
        %s503 = scalar_lea.sflag [#allocation6], %s502
        %s504 = sand.u32 %s190, 1
        %s505 = smul.addr %s504, 8
        %s506 = scalar_lea.vmem [#allocation7], %s505
        // Predicated region
        $region45: #{tpu_custom_call.1} parent=39 // pred_check
          %p507 = pneg %p200
        $region46: #{tpu_custom_call.1} parent=39 // pred_check_branch
          %509 = sbr.rel (%p507) target = $region48
        $region47: #{tpu_custom_call.1} parent=39 // pred_region
          %s511 = ssub.s32 128, 128
          %512 = vsyncadd %s503, %s511
          %s513 = sadd.s32 %s27, %s26
          %s514 = smul.addr %s513, 128
          %s515 = scalar_lea.hbm %s5, %s514
          %s517 = sshll.u32 %s506, 4
          %s518 = int_to_ptr.vmem [resolvable:$true] %s517
          %520 = dma.vmem_to_hbm [thread:$0]  %s518, 128, %s515, %s503
        $region48: #{tpu_custom_call.1} parent=39 // pred_fallthru
          _
      $region40: #{tpu_custom_call.1} parent=5 // pred_fallthru
        _
      %p521 = scmp.le.s32.totalorder 2, %s17
      // Predicated region
      $region49: #{tpu_custom_call.1} parent=5 // pred_check
        %p522 = pneg %p521
      $region50: #{tpu_custom_call.1} parent=5 // pred_check_branch
        %524 = sbr.rel (%p522) target = $region52
      $region51: #{tpu_custom_call.1} parent=5 // pred_region
        %s525 = ssub.s32 %s17, 2
        // Predicated region
        $region53: #{tpu_custom_call.1} parent=51 // pred_check
          %p526 = pneg %p206
        $region54: #{tpu_custom_call.1} parent=51 // pred_check_branch
          %528 = sbr.rel (%p526) target = $region56
        $region55: #{tpu_custom_call.1} parent=51 // pred_region
          %s529 = sand.u32 %s191, 1
          %s530 = scalar_lea.sflag [#allocation6], %s529
          %s531 = sand.u32 %s191, 1
          %s532 = smul.addr %s531, 8
          %s533 = scalar_lea.vmem [#allocation7], %s532
          %534 = dma.done %s530, 128
        $region56: #{tpu_custom_call.1} parent=51 // pred_fallthru
          _
      $region52: #{tpu_custom_call.1} parent=5 // pred_fallthru
        _
    $region6: #{tpu_custom_call.1} parent=1 // loop_footer
      %s21 = sadd.s32 1, %s17
    $region7: #{tpu_custom_call.1} parent=1 // loop_footer_branch
      %16 = sbr.rel target = $region3
    $region8: #{tpu_custom_call.1} parent=1 // loop_exit
      _
    %535 = vsyncpa [#allocation5], 1
    %s536 = scalar_lea.sflag [#allocation5], 1
    %537 = vsyncpa %s536, 1
    %538 = vsyncpa [#allocation6], 1
    %s539 = scalar_lea.sflag [#allocation6], 1
    %540 = vsyncpa %s539, 1

</llo_original>
